<compile_context>
chip_gen: v5e
topology: v5e:2x2
jax: 0.10.0
libtpu: 0.0.40
codegen_flags: <defaults>
</compile_context>

<pallas_src>
import functools

import jax
import jax.numpy as jnp
from jax import lax
from jax.experimental import pallas as pl
from jax.experimental.pallas import tpu as pltpu

_EPS = 1e-5
_SELU_ALPHA = 1.6732632423543772
_SELU_SCALE = 1.0507009873554805

# Keep the per-strip elementwise chain resident in vregs (~16K f32 elems per
# live array out of the 64K-elem register file).
_STRIP_ELEMS = 16384
# Cap rows per block so the (rows, 1) stats columns stay a handful of vregs.
_MAX_BLOCK_ROWS = 256


def _gnselu_kernel(x_ref, w_ref, b_ref, o_ref, *, chunk, n_strips, inv_count,
                   per_row_affine, unrolled):
    rows = x_ref.shape[0]

    def load_f32(off):
        return x_ref[:, pl.ds(off, chunk)].astype(jnp.float32)

    def reduce_strips(strip_fn):
        init = jnp.zeros((rows, 1), jnp.float32)
        if unrolled:                      # static offsets, fully unrolled
            acc = init
            for j in range(n_strips):
                acc = acc + strip_fn(j * chunk)
            return acc

        def body(j, acc):                 # dynamic, 128-aligned offsets
            return acc + strip_fn(pl.multiple_of(j * chunk, 128))
        return lax.fori_loop(0, n_strips, body, init)

    def foreach_strip(strip_fn):
        if unrolled:
            for j in range(n_strips):
                strip_fn(j * chunk)
            return

        def body(j, carry):
            strip_fn(pl.multiple_of(j * chunk, 128))
            return carry
        lax.fori_loop(0, n_strips, body, 0)

    # ---- Pass 1: group mean (one row == one (sample, group)). ----
    mean = reduce_strips(
        lambda off: jnp.sum(load_f32(off), axis=-1, keepdims=True)) * inv_count

    # ---- Pass 2: group variance.  Two-pass (shifted) form keeps parity with
    # PyTorch GroupNorm even for large-mean inputs (vs one-pass E[x^2]-E[x]^2).
    def sqdev(off):
        d = load_f32(off) - mean
        return jnp.sum(d * d, axis=-1, keepdims=True)

    var = reduce_strips(sqdev) * inv_count
    inv = lax.rsqrt(var + _EPS)

    if per_row_affine:
        # num_groups == C: gamma/beta are per-row scalars, so normalize+affine
        # folds into a single per-row scale/shift FMA (computed once per block).
        scale_col = inv * w_ref[...]                 # (rows, 1)
        shift_col = b_ref[...] - mean * scale_col    # (rows, 1)

    # ---- Pass 3: normalize + affine + SELU; chain stays in vregs per strip.
    # Element math kept in f32 on purpose (v5e has no bf16 VPU/EUP).
    # TODO(synk): optional bf16 element-math path for v6e/v7x once re-verified.
    def apply_strip(off):
        xs = load_f32(off)
        if per_row_affine:
            y = xs * scale_col + shift_col
        else:
            ws = w_ref[:, pl.ds(off, chunk)]         # resident expanded gamma
            bs = b_ref[:, pl.ds(off, chunk)]         # resident expanded beta
            y = (xs - mean) * (inv * ws) + bs
        # SELU; clamp exp argument so the unselected branch never overflows.
        # TODO(synk): switch to jnp.expm1 once its Mosaic lowering is
        # guaranteed on all target TPU generations.
        neg = _SELU_ALPHA * (jnp.exp(jnp.minimum(y, 0.0)) - 1.0)
        o_ref[:, pl.ds(off, chunk)] = (
            _SELU_SCALE * jnp.where(y > 0.0, y, neg)).astype(o_ref.dtype)

    foreach_strip(apply_strip)


def _divisors(n):
    return [d for d in range(1, n + 1) if n % d == 0]


def _pick_bn(n, g, sample_bytes, target_bytes):
    """Samples per grid step: amortize step overhead, keep rows 8-aligned,
    keep several grid steps when samples are big enough to be worth it."""
    if n >= 8 and sample_bytes >= (128 << 10):
        step_cap = max(1, n // 8)          # >= 8 steps (>= 4 per v7x core)
    elif n >= 2 and sample_bytes >= (256 << 10):
        step_cap = max(1, n // 2)
    else:
        step_cap = n                       # tiny samples: maximize the block
    ideal = max(1, target_bytes // max(sample_bytes, 1))
    cap = max(1, min(step_cap, ideal, max(1, _MAX_BLOCK_ROWS // g)))
    valid = [d for d in _divisors(n) if (d * g) % 8 == 0 or d == n]
    below = [d for d in valid if d <= cap]
    if below:
        return max(below)
    return min(valid)                      # always non-empty (d == n is valid)


def _pick_chunk(length, rows):
    """Largest 128-multiple divisor of `length` keeping strips ~vreg-sized."""
    if length % 128 != 0:
        return length                      # unaligned lane dim: single strip
    cap = max(128, (_STRIP_ELEMS // max(rows, 1)) // 128 * 128)
    cap = min(cap, length)
    best, d = 128, 128
    while d <= cap:
        if length % d == 0:
            best = d
        d += 128
    return best


@jax.jit
def gnselu(x, weight, bias):
    """x: (N, C, H, W); weight/bias: (C,).  Returns SELU(GroupNorm(x)) in x.dtype."""
    n, c, h, w = x.shape
    g = 32 if c >= 32 else c               # num_groups, per the PyTorch module
    if c % g != 0:
        raise ValueError(f"nn.GroupNorm requires C % num_groups == 0; got C={c}, groups={g}")
    cg = c // g
    hw = h * w
    lanes = cg * hw
    rows_total = n * g
    itemsize = x.dtype.itemsize

    # Generation-aware budgets (proxy: VMEM capacity -> v5e/v6e 128 MiB, v7x 64 MiB).
    try:
        vmem_cap = int(pltpu.get_tpu_info().vmem_capacity_bytes)
    except Exception:
        vmem_cap = 64 << 20
    target_bytes = (2 << 20) if vmem_cap >= (96 << 20) else (1 << 20)

    sample_bytes = c * hw * itemsize
    bn = _pick_bn(n, g, sample_bytes, target_bytes)
    block_rows = bn * g
    chunk = _pick_chunk(lanes, block_rows)
    n_strips = lanes // chunk
    unrolled = n_strips <= 8

    # 2-D view: one row per (sample, group); no fp32 up-cast in HBM.
    x2 = x.reshape(rows_total, lanes)

    per_row_affine = (cg == 1)
    wf = weight.astype(jnp.float32)
    bf = bias.astype(jnp.float32)
    if per_row_affine:
        w_in = jnp.tile(wf.reshape(g, 1), (bn, 1))          # (block_rows, 1)
        b_in = jnp.tile(bf.reshape(g, 1), (bn, 1))
        w_block = (block_rows, 1)
    else:
        w_exp = jnp.broadcast_to(wf.reshape(g, cg, 1), (g, cg, hw)).reshape(g, lanes)
        b_exp = jnp.broadcast_to(bf.reshape(g, cg, 1), (g, cg, hw)).reshape(g, lanes)
        w_in = jnp.tile(w_exp, (bn, 1))                      # (block_rows, lanes)
        b_in = jnp.tile(b_exp, (bn, 1))
        w_block = (block_rows, lanes)

    # VMEM budget: double-buffered in/out blocks + resident gamma/beta + strip
    # scratch + headroom, capped at ~3/4 of this chip's physical VMEM.
    blk_bytes = block_rows * lanes * itemsize
    wb_bytes = (w_in.size + b_in.size) * 4
    strip_bytes = 8 * block_rows * chunk * 4
    need = 4 * blk_bytes + 2 * wb_bytes + strip_bytes + (2 << 20)
    vmem_limit = int(min(max(need, 16 << 20), (vmem_cap * 3) // 4))
    # TODO(synk): if a single sample's working set exceeds this budget (very
    # large C*H*W), add an HW-chunked two-phase grid instead of clamping.

    kernel = functools.partial(
        _gnselu_kernel, chunk=chunk, n_strips=n_strips,
        inv_count=1.0 / float(lanes), per_row_affine=per_row_affine,
        unrolled=unrolled)

    out = pl.pallas_call(
        kernel,
        out_shape=jax.ShapeDtypeStruct((rows_total, lanes), x.dtype),
        grid_spec=pltpu.PrefetchScalarGridSpec(
            num_scalar_prefetch=0,
            grid=(n // bn,),
            in_specs=[
                pl.BlockSpec((block_rows, lanes), lambda i: (i, 0)),
                pl.BlockSpec(w_block, lambda i: (0, 0)),   # gamma: resident
                pl.BlockSpec(w_block, lambda i: (0, 0)),   # beta : resident
            ],
            out_specs=pl.BlockSpec((block_rows, lanes), lambda i: (i, 0)),
        ),
        compiler_params=pltpu.CompilerParams(
            dimension_semantics=("parallel",),
            vmem_limit_bytes=vmem_limit,
        ),
    )(x2, w_in, b_in)

    return out.reshape(n, c, h, w)


def _reference(x, weight, bias):
    """Pure-JAX GroupNorm + SELU reference (f32 math)."""
    n, c, h, w = x.shape
    g = 32 if c >= 32 else c
    xf = x.astype(jnp.float32).reshape(n, g, -1)
    mean = jnp.mean(xf, axis=-1, keepdims=True)
    var = jnp.mean((xf - mean) ** 2, axis=-1, keepdims=True)
    xhat = ((xf - mean) * lax.rsqrt(var + _EPS)).reshape(n, c, h, w)
    wf = weight.astype(jnp.float32)[None, :, None, None]
    bf = bias.astype(jnp.float32)[None, :, None, None]
    y = xhat * wf + bf
    return _SELU_SCALE * jnp.where(y > 0, y, _SELU_ALPHA * jnp.expm1(y))


if __name__ == "__main__":
    key = jax.random.PRNGKey(0)
    kx, kw, kb, kx2, kw2, kb2, kx4, kw4, kb4 = jax.random.split(key, 9)

    # Case 1: C < 32 -> num_groups = C, per-row scale/shift fold, fp32.
    N, C, H, W = 2, 4, 16, 16
    x = jax.random.normal(kx, (N, C, H, W), dtype=jnp.float32)
    weight = 1.0 + 0.1 * jax.random.normal(kw, (C,), dtype=jnp.float32)
    bias = 0.1 * jax.random.normal(kb, (C,), dtype=jnp.float32)
    out = jax.block_until_ready(gnselu(x, weight, bias))
    assert out.dtype == x.dtype
    assert jnp.allclose(out, _reference(x, weight, bias), atol=1e-5, rtol=1e-5), \
        "fp32 C<32 mismatch"

    # Case 2: C >= 32 -> 32 groups of 2 channels; hw=64 folds to 128 dense lanes.
    N2, C2, H2, W2 = 2, 64, 8, 8
    x2 = jax.random.normal(kx2, (N2, C2, H2, W2), dtype=jnp.float32)
    weight2 = 1.0 + 0.1 * jax.random.normal(kw2, (C2,), dtype=jnp.float32)
    bias2 = 0.1 * jax.random.normal(kb2, (C2,), dtype=jnp.float32)
    out2 = jax.block_until_ready(gnselu(x2, weight2, bias2))
    assert jnp.allclose(out2, _reference(x2, weight2, bias2), atol=1e-5, rtol=1e-5), \
        "fp32 C>=32 mismatch"

    # Case 3: bf16 stays bf16 end-to-end (stats and element math still f32).
    xb = x.astype(jnp.bfloat16)
    outb = jax.block_until_ready(gnselu(xb, weight, bias))
    assert outb.dtype == jnp.bfloat16
    assert jnp.allclose(outb.astype(jnp.float32), _reference(xb, weight, bias),
                        atol=3e-2, rtol=3e-2), "bf16 mismatch"

    # Case 4: larger spatial extent -> multi-strip fori path, multiple grid steps.
    N4, C4, H4, W4 = 4, 64, 32, 64
    x4 = jax.random.normal(kx4, (N4, C4, H4, W4), dtype=jnp.float32)
    weight4 = 1.0 + 0.1 * jax.random.normal(kw4, (C4,), dtype=jnp.float32)
    bias4 = 0.1 * jax.random.normal(kb4, (C4,), dtype=jnp.float32)
    out4 = jax.block_until_ready(gnselu(x4, weight4, bias4))
    assert jnp.allclose(out4, _reference(x4, weight4, bias4), atol=3e-5, rtol=3e-5), \
        "fp32 multi-strip mismatch"

    print("KERNEL_OK")
</pallas_src>

<mosaic_0001>
module attributes {stable_mosaic.version = 11 : i64} {
  func.func @_gnselu_kernel(%arg0: i32, %arg1: memref<8x256xf32, #tpu.memory_space<vmem>>, %arg2: memref<8x1xf32, #tpu.memory_space<vmem>>, %arg3: memref<8x1xf32, #tpu.memory_space<vmem>>, %arg4: memref<8x256xf32, #tpu.memory_space<vmem>>) attributes {dimension_semantics = [#tpu.dimension_semantics<parallel>], iteration_bounds = array<i64: 1>, scalar_prefetch = 0 : i64, scratch_operands = 0 : i64, tpu.core_type = #tpu.core_type<tc>, window_params = [{transform_indices = @transform_0, window_bounds = array<i64: 8, 256>}, {pipeline_mode = #tpu.pipeline_mode<synchronous>, transform_indices = @transform_1, window_bounds = array<i64: 8, 1>}, {pipeline_mode = #tpu.pipeline_mode<synchronous>, transform_indices = @transform_2, window_bounds = array<i64: 8, 1>}, {transform_indices = @transform_3, window_bounds = array<i64: 8, 256>}]} {
    %cst = arith.constant 0.000000e+00 : f32
    %0 = vector.broadcast %cst : f32 to vector<8x1xf32>
    %c0 = arith.constant 0 : index
    %c0_0 = arith.constant 0 : index
    %1 = vector.load %arg1[%c0, %c0_0] : memref<8x256xf32, #tpu.memory_space<vmem>>, vector<8x256xf32>
    %cst_1 = arith.constant dense<0.000000e+00> : vector<8xf32>
    %2 = vector.multi_reduction <add>, %1, %cst_1 [1] : vector<8x256xf32> to vector<8xf32>
    %3 = vector.shape_cast %2 : vector<8xf32> to vector<8x1xf32>
    %4 = arith.addf %0, %3 : vector<8x1xf32>
    %cst_2 = arith.constant 3.906250e-03 : f32
    %5 = vector.broadcast %cst_2 : f32 to vector<8x1xf32>
    %6 = arith.mulf %4, %5 : vector<8x1xf32>
    %cst_3 = arith.constant 0.000000e+00 : f32
    %7 = vector.broadcast %cst_3 : f32 to vector<8x1xf32>
    %c0_4 = arith.constant 0 : index
    %c0_5 = arith.constant 0 : index
    %8 = vector.load %arg1[%c0_4, %c0_5] : memref<8x256xf32, #tpu.memory_space<vmem>>, vector<8x256xf32>
    %9 = vector.broadcast %6 : vector<8x1xf32> to vector<8x256xf32>
    %10 = arith.subf %8, %9 : vector<8x256xf32>
    %11 = arith.mulf %10, %10 : vector<8x256xf32>
    %cst_6 = arith.constant dense<0.000000e+00> : vector<8xf32>
    %12 = vector.multi_reduction <add>, %11, %cst_6 [1] : vector<8x256xf32> to vector<8xf32>
    %13 = vector.shape_cast %12 : vector<8xf32> to vector<8x1xf32>
    %14 = arith.addf %7, %13 : vector<8x1xf32>
    %cst_7 = arith.constant 3.906250e-03 : f32
    %15 = vector.broadcast %cst_7 : f32 to vector<8x1xf32>
    %16 = arith.mulf %14, %15 : vector<8x1xf32>
    %cst_8 = arith.constant 9.99999974E-6 : f32
    %17 = vector.broadcast %cst_8 : f32 to vector<8x1xf32>
    %18 = arith.addf %16, %17 : vector<8x1xf32>
    %19 = math.rsqrt %18 : vector<8x1xf32>
    %c0_9 = arith.constant 0 : index
    %c0_10 = arith.constant 0 : index
    %20 = vector.load %arg2[%c0_9, %c0_10] : memref<8x1xf32, #tpu.memory_space<vmem>>, vector<8x1xf32>
    %21 = arith.mulf %19, %20 : vector<8x1xf32>
    %c0_11 = arith.constant 0 : index
    %c0_12 = arith.constant 0 : index
    %22 = vector.load %arg3[%c0_11, %c0_12] : memref<8x1xf32, #tpu.memory_space<vmem>>, vector<8x1xf32>
    %23 = arith.mulf %6, %21 : vector<8x1xf32>
    %24 = arith.subf %22, %23 : vector<8x1xf32>
    %c0_13 = arith.constant 0 : index
    %c0_14 = arith.constant 0 : index
    %25 = vector.load %arg1[%c0_13, %c0_14] : memref<8x256xf32, #tpu.memory_space<vmem>>, vector<8x256xf32>
    %26 = vector.broadcast %21 : vector<8x1xf32> to vector<8x256xf32>
    %27 = arith.mulf %25, %26 : vector<8x256xf32>
    %28 = vector.broadcast %24 : vector<8x1xf32> to vector<8x256xf32>
    %29 = arith.addf %27, %28 : vector<8x256xf32>
    %cst_15 = arith.constant 0.000000e+00 : f32
    %30 = vector.broadcast %cst_15 : f32 to vector<8x256xf32>
    %31 = arith.minimumf %29, %30 : vector<8x256xf32>
    %32 = math.exp %31 : vector<8x256xf32>
    %cst_16 = arith.constant 1.000000e+00 : f32
    %33 = vector.broadcast %cst_16 : f32 to vector<8x256xf32>
    %34 = arith.subf %32, %33 : vector<8x256xf32>
    %cst_17 = arith.constant 1.67326319 : f32
    %35 = vector.broadcast %cst_17 : f32 to vector<8x256xf32>
    %36 = arith.mulf %35, %34 : vector<8x256xf32>
    %cst_18 = arith.constant 0.000000e+00 : f32
    %37 = vector.broadcast %cst_18 : f32 to vector<8x256xf32>
    %38 = arith.cmpf ogt, %29, %37 : vector<8x256xf32>
    %39 = arith.select %38, %29, %36 : vector<8x256xi1>, vector<8x256xf32>
    %cst_19 = arith.constant 1.05070102 : f32
    %40 = vector.broadcast %cst_19 : f32 to vector<8x256xf32>
    %41 = arith.mulf %40, %39 : vector<8x256xf32>
    %c0_20 = arith.constant 0 : index
    %c0_21 = arith.constant 0 : index
    %42 = vector.load %arg4[%c0_20, %c0_21] : memref<8x256xf32, #tpu.memory_space<vmem>>, vector<8x256xf32>
    tpu.vector_store %arg4[%c0_20, %c0_21], %41 {strides = array<i32>} : memref<8x256xf32, #tpu.memory_space<vmem>>, vector<8x256xf32>,
    return
  }
  func.func @transform_0(%arg0: i32) -> (i32, i32) {
    %c0_i32 = arith.constant 0 : i32
    %c0_i32_0 = arith.constant 0 : i32
    return %arg0, %c0_i32 : i32, i32
  }
  func.func @transform_1(%arg0: i32) -> (i32, i32) {
    %c0_i32 = arith.constant 0 : i32
    %c0_i32_0 = arith.constant 0 : i32
    %c0_i32_1 = arith.constant 0 : i32
    return %c0_i32, %c0_i32_0 : i32, i32
  }
  func.func @transform_2(%arg0: i32) -> (i32, i32) {
    %c0_i32 = arith.constant 0 : i32
    %c0_i32_0 = arith.constant 0 : i32
    %c0_i32_1 = arith.constant 0 : i32
    return %c0_i32, %c0_i32_0 : i32, i32
  }
  func.func @transform_3(%arg0: i32) -> (i32, i32) {
    %c0_i32 = arith.constant 0 : i32
    %c0_i32_0 = arith.constant 0 : i32
    return %arg0, %c0_i32 : i32, i32
  }
}

</mosaic_0001>

<llo_original>
// kernel: gnselu.1
$region0: #{gnselu.1}
  #allocation0 [shape = 'u32[]', space=smem, size = 0x4, offset = 0x4, fixed_abs, tag = 'smem constant byte address 0x4 - core index']
  #allocation1 [shape = 'u32[72,128]{1,0:T(1,128)}', space=vmem, size = 0x9000, scoped, tag = 'internal scratch']
  %s0 = inlined_call_operand.vmem [shape: f32[8,256], index: 0, kind: input, shape index: {}]
  %s1 = inlined_call_operand.vmem [shape: f32[8,1], index: 1, kind: input, shape index: {}]
  %s2 = inlined_call_operand.vmem [shape: f32[8,1], index: 2, kind: input, shape index: {}]
  %s3 = inlined_call_operand.vmem [shape: f32[8,256], index: 3, kind: output, shape index: {}]
  %s4 = sld [smem:[#allocation0]]
  $region22: #{gnselu.1} parent=0
    _
  %s6 = ssub.s32 1, %s4
  %s7 = scalar_select 0, %s6, %s4
  // Predicated region
  $region2: #{gnselu.1} parent=0 // pred_check
    _
  $region3: #{gnselu.1} parent=0 // pred_check_branch
    %9 = sbr.rel (0) target = $region5
  $region4: #{gnselu.1} parent=0 // pred_region
    _
  $region5: #{gnselu.1} parent=0 // pred_fallthru
    _
  // Predicated region
  $region6: #{gnselu.1} parent=0 // pred_check
    _
  $region7: #{gnselu.1} parent=0 // pred_check_branch
    %11 = sbr.rel (0) target = $region9
  $region8: #{gnselu.1} parent=0 // pred_region
    _
  $region9: #{gnselu.1} parent=0 // pred_fallthru
    _
  // Predicated region
  $region10: #{gnselu.1} parent=0 // pred_check
    _
  $region11: #{gnselu.1} parent=0 // pred_check_branch
    %13 = sbr.rel (0) target = $region13
  $region12: #{gnselu.1} parent=0 // pred_region
    _
  $region13: #{gnselu.1} parent=0 // pred_fallthru
    _
  %v14 = vld [vmem:[%s0] sm:$0xff]
  %v15 = vld [vmem:[%s0 + $0x8] sm:$0xff]
  %v16 = vadd.f32 %v14, %v15
  %17 = vadd.xlane.f32.xlu0 %v16
  %v18 = vpop.xlane.xlu0 %17
  %v19 = vadd.f32 %v18, 0.0
  %v20 = vmul.f32 %v19, 0.00390625
  %v21 = vsub.f32 %v14, %v20
  %v22 = vsub.f32 %v15, %v20
  %v23 = vmul.f32 %v21, %v21
  %v24 = vmul.f32 %v22, %v22
  %v25 = vadd.f32 %v23, %v24
  %26 = vadd.xlane.f32.xlu0 %v25
  %v27 = vpop.xlane.xlu0 %26
  %v28 = vadd.f32 %v27, 0.0
  %v29 = vmul.f32 %v28, 0.00390625
  %v30 = vadd.f32 %v29, 1e-05
  %v31 = vrsqrt.pop %v30
  %v32 = vmul.f32 %v31, %v30
  %v33 = vmul.f32 %v32, %v31
  %v34 = vmul.f32 0.5, %v33
  %v35 = vsub.f32 1.5, %v34
  %v36 = vmul.f32 %v31, %v35
  %vm37 = vweird.f32 %v30
  %vm38 = vweird.f32 %v31
  %vm39 = vmor %vm37, %vm38
  %v40 = vsel %vm39, %v31, %v36
  %v41 = vld [vmem:[%s1] sm:$0xff]
  %v42 = vmul.f32 %v40, %v41
  %v43 = vld [vmem:[%s2] sm:$0xff]
  %v44 = vmul.f32 %v20, %v42
  %v45 = vsub.f32 %v43, %v44
  %47 = vset.pattern.permute.xlu0 0
  %48 = vperm.xlu0 %47, %v42
  %v49 = vpop.permute.xlu0 %48
  %v51 = vmul.f32 %v14, %v49
  %v52 = vmul.f32 %v15, %v49
  %54 = vset.pattern.permute.xlu0 0
  %55 = vperm.xlu0 %54, %v45
  %v56 = vpop.permute.xlu0 %55
  %v58 = vadd.f32 %v51, %v56
  %v59 = vadd.f32 %v52, %v56
  %v60 = vmin.f32 %v58, 0.0
  %v61 = vmin.f32 %v59, 0.0
  %v62 = vmul.f32 %v60, 1.442695
  %v63 = vpow.pop %v62
  %v64 = vmul.f32 %v61, 1.442695
  %v65 = vpow.pop %v64
  %v66 = vsub.f32 %v63, 1.0
  %v67 = vsub.f32 %v65, 1.0
  %v68 = vmul.f32 %v66, 1.6732632
  %v69 = vmul.f32 %v67, 1.6732632
  %vm70 = vcmp.gt.f32.partialorder %v58, 0.0
  %vm71 = vcmp.gt.f32.partialorder %v59, 0.0
  %v72 = vsel %vm70, %v58, %v68
  %v73 = vsel %vm71, %v59, %v69
  %v74 = vmul.f32 %v72, 1.050701
  %v75 = vmul.f32 %v73, 1.050701
  %76 = vst [vmem:[%s3] sm:$0xff] %v74
  %77 = vst [vmem:[%s3 + $0x8] sm:$0xff] %v75
  // Predicated region
  $region14: #{gnselu.1} parent=0 // pred_check
    _
  $region15: #{gnselu.1} parent=0 // pred_check_branch
    %79 = sbr.rel (0) target = $region17
  $region16: #{gnselu.1} parent=0 // pred_region
    _
  $region17: #{gnselu.1} parent=0 // pred_fallthru
    _
  // Predicated region
  $region18: #{gnselu.1} parent=0 // pred_check
    _
  $region19: #{gnselu.1} parent=0 // pred_check_branch
    %81 = sbr.rel (0) target = $region21
  $region20: #{gnselu.1} parent=0 // pred_region
    _
  $region21: #{gnselu.1} parent=0 // pred_fallthru
    _

</llo_original>
